<compile_context>
chip_gen: v7x
topology: tpu7x:2x2x1
jax: 0.10.0
libtpu: 0.0.40
codegen_flags: <defaults>
</compile_context>

<pallas_src>
import jax
import jax.numpy as jnp
from jax.experimental import pallas as pl
from jax.experimental.pallas import tpu as pltpu


# ---------------------------------------------------------------------------
# Kernel: broadcasted elementwise add (VPU only)
# ---------------------------------------------------------------------------
def _uap_add_kernel(x_ref, uap_ref, o_ref):
    # x_ref / o_ref: (TB, TN);  uap_ref: (1, TN) — sublane-broadcast over rows.
    o_ref[...] = x_ref[...] + uap_ref[...]


# ---------------------------------------------------------------------------
# Tiling helpers
# ---------------------------------------------------------------------------
def _round_down(v, m):
    return (v // m) * m


def _pick_target_bytes():
    """Per-step x-block byte target, by chip generation.

    v7x (64 MiB VMEM / ~3.2 TB/s HBM) wants fatter blocks to amortize the
    ~0.35 us per-step overhead; v5e/v6e are essentially at roofline by ~4 MiB.
    """
    try:
        info = pltpu.get_tpu_info()
        vmem = getattr(info, "vmem_capacity_bytes", None)
        if vmem is not None and vmem <= (96 << 20):   # 64 MiB per TC -> v7x
            return 8 << 20
    except Exception:
        pass
    return 4 << 20


# ---------------------------------------------------------------------------
# Wrapper
# ---------------------------------------------------------------------------
def uap_forward(x, uap, mean=None, std=None, *, donate_x=False,
                target_block_bytes=None, max_lane_tile_elems=None):
    """Pallas implementation of UAP.forward.

    x:    (B, C, H, W)
    uap:  (C, H, W)
    mean, std: optional (C,) — if given, the normalization path is used.
    donate_x: alias the output onto x's buffer (only if caller no longer
              needs x; removes the separate output allocation in HBM).
    target_block_bytes / max_lane_tile_elems: tiling overrides (testing/tuning).
    """
    B, C, H, W = x.shape
    assert uap.shape == (C, H, W)
    N = C * H * W
    dt = x.dtype
    itemsize = dt.itemsize

    # Fold normalization into the perturbation:
    #   ((x*std + mean) + uap - mean)/std == x + uap/std
    # (exact in real arithmetic; fp rounding order differs ~1e-6 in f32).
    if mean is not None:
        std_b = jnp.asarray(std, dt).reshape(C, 1, 1)
        uap_eff = uap.astype(dt) / std_b
    else:
        uap_eff = uap.astype(dt)

    # Lane-dense 2D views: rows are whole flattened images.
    x2 = x.reshape(B, N)
    uap2 = uap_eff.reshape(1, N)

    # ---- tile selection ----------------------------------------------------
    granule = max(8, 32 // itemsize)          # packed sublanes: 8 f32 / 16 bf16 / 32 int8
    target = int(target_block_bytes) if target_block_bytes else _pick_target_bytes()

    # Lane tile: bounded multiple-of-128 chunk of the feature axis so the block
    # never scales with image size (or the full row when it is small).
    lane_cap = (int(max_lane_tile_elems) if max_lane_tile_elems
                else max(128, _round_down((1 << 20) // itemsize, 128)))
    if N <= lane_cap:
        TN = N                                # full extent — always legal
    else:
        TN = max(128, _round_down(lane_cap, 128))

    # Row tile: fill ~`target` bytes of x per grid step.
    tb = max(1, target // (TN * itemsize))
    if tb < granule and TN > 128:
        # Rows are huge: shrink the lane tile instead of overshooting the target.
        TN = max(128, _round_down(target // (granule * itemsize), 128))
        tb = max(1, target // (TN * itemsize))
    if tb >= B:
        TB = B                                # full extent — always legal
    else:
        TB = max(granule, _round_down(tb, granule))
        # Prefer a row tile that divides B (no masked epilogue block) as long
        # as it costs at most half the block size.
        for cand in range(TB, max(granule, TB // 2) - 1, -granule):
            if B % cand == 0:
                TB = cand
                break

    # Lane tiles outer, row tiles inner: uap's block index is constant across
    # the inner loop, so it is fetched once per lane tile and stays resident.
    grid = (pl.cdiv(N, TN), pl.cdiv(B, TB))

    x_spec = pl.BlockSpec((TB, TN), lambda n, r: (r, n))
    uap_spec = pl.BlockSpec((1, TN), lambda n, r: (0, n))
    out_spec = pl.BlockSpec((TB, TN), lambda n, r: (r, n))

    # Explicit scoped-VMEM budget: double-buffered x + out blocks, plus uap,
    # plus slack; capped at 48 MiB (headroom under v7x's 64 MiB physical).
    block_bytes = TB * TN * itemsize
    vmem_needed = 4 * block_bytes + 2 * TN * itemsize
    vmem_limit = int(min(48 << 20, max(vmem_needed + (4 << 20), 16 << 20)))

    call_kwargs = {}
    if donate_x:
        call_kwargs["input_output_aliases"] = {0: 0}

    out2 = pl.pallas_call(
        _uap_add_kernel,
        out_shape=jax.ShapeDtypeStruct((B, N), dt),
        grid_spec=pltpu.PrefetchScalarGridSpec(
            num_scalar_prefetch=0,
            grid=grid,
            in_specs=[x_spec, uap_spec],
            out_specs=out_spec,
        ),
        compiler_params=pltpu.CompilerParams(
            dimension_semantics=("parallel", "parallel"),
            vmem_limit_bytes=vmem_limit),
        cost_estimate=pl.CostEstimate(
            flops=B * N,
            transcendentals=0,
            bytes_accessed=2 * B * N * itemsize + N * itemsize),
        **call_kwargs,
    )(x2, uap2)

    return out2.reshape(B, C, H, W)


# ---------------------------------------------------------------------------
# Main
# ---------------------------------------------------------------------------
if __name__ == "__main__":
    key = jax.random.PRNGKey(0)
    k_x, k_uap, k_x2 = jax.random.split(key, 3)

    # --- Small, module-consistent shapes ------------------------------------
    B, C, H, W = 2, 4, 16, 16
    x = jax.random.normal(k_x, (B, C, H, W), dtype=jnp.float32)

    # Module __init__ uses zeros; use a small deterministic random perturbation
    # so the add is non-trivial.
    uap = 0.05 * jax.random.normal(k_uap, (C, H, W), dtype=jnp.float32)

    # Default forward path (no normalization): adv_x = x + uap
    adv = jax.block_until_ready(uap_forward(x, uap))
    ref = x + uap[None]
    assert jnp.allclose(adv, ref, atol=1e-6), "simple path mismatch"

    # Normalization path (set_normalization_used + forward). The kernel runs
    # the algebraically folded x + uap/std; compare against the unfolded
    # formula within fp32 tolerance.
    mean = jnp.array([0.1, 0.2, 0.3, 0.4], dtype=jnp.float32)
    std = jnp.array([0.5, 0.6, 0.7, 0.8], dtype=jnp.float32)
    adv_n = jax.block_until_ready(uap_forward(x, uap, mean, std))
    m = mean.reshape(1, C, 1, 1)
    s = std.reshape(1, C, 1, 1)
    ref_n = ((x * s + m) + uap[None] - m) / s
    assert jnp.allclose(adv_n, ref_n, atol=1e-5), "normalized path mismatch"

    # --- Exercise 2D (lane, row) tiling + masked epilogue row block ---------
    B2 = 10                                    # not a multiple of the 8-row granule
    x_big = jax.random.normal(k_x2, (B2, C, H, W), dtype=jnp.float32)
    adv_t = jax.block_until_ready(
        uap_forward(x_big, uap, target_block_bytes=8 * 1024,
                    max_lane_tile_elems=256))   # forces grid=(4, 2)
    assert jnp.allclose(adv_t, x_big + uap[None], atol=1e-6), "tiled path mismatch"

    print("KERNEL_OK")
</pallas_src>

<mosaic_0001>
module attributes {stable_mosaic.version = 11 : i64} {
  func.func @_uap_add_kernel(%arg0: i32, %arg1: i32, %arg2: memref<2x1024xf32, #tpu.memory_space<vmem>>, %arg3: memref<1x1024xf32, #tpu.memory_space<vmem>>, %arg4: memref<2x1024xf32, #tpu.memory_space<vmem>>) attributes {dimension_semantics = [#tpu.dimension_semantics<parallel>, #tpu.dimension_semantics<parallel>], iteration_bounds = array<i64: 1, 1>, scalar_prefetch = 0 : i64, scratch_operands = 0 : i64, tpu.core_type = #tpu.core_type<tc>, window_params = [{transform_indices = @transform_0, window_bounds = array<i64: 2, 1024>}, {transform_indices = @transform_1, window_bounds = array<i64: 1, 1024>}, {transform_indices = @transform_2, window_bounds = array<i64: 2, 1024>}]} {
    %c0 = arith.constant 0 : index
    %c0_0 = arith.constant 0 : index
    %0 = vector.load %arg2[%c0, %c0_0] : memref<2x1024xf32, #tpu.memory_space<vmem>>, vector<2x1024xf32>
    %c0_1 = arith.constant 0 : index
    %c0_2 = arith.constant 0 : index
    %1 = vector.load %arg3[%c0_1, %c0_2] : memref<1x1024xf32, #tpu.memory_space<vmem>>, vector<1x1024xf32>
    %2 = vector.broadcast %1 : vector<1x1024xf32> to vector<2x1024xf32>
    %3 = arith.addf %0, %2 : vector<2x1024xf32>
    %c0_3 = arith.constant 0 : index
    %c0_4 = arith.constant 0 : index
    %4 = vector.load %arg4[%c0_3, %c0_4] : memref<2x1024xf32, #tpu.memory_space<vmem>>, vector<2x1024xf32>
    tpu.vector_store %arg4[%c0_3, %c0_4], %3 {strides = array<i32>} : memref<2x1024xf32, #tpu.memory_space<vmem>>, vector<2x1024xf32>,
    return
  }
  func.func @transform_0(%arg0: i32, %arg1: i32) -> (i32, i32) {
    %c0_i32 = arith.constant 0 : i32
    return %arg1, %arg0 : i32, i32
  }
  func.func @transform_1(%arg0: i32, %arg1: i32) -> (i32, i32) {
    %c0_i32 = arith.constant 0 : i32
    %c0_i32_0 = arith.constant 0 : i32
    return %c0_i32, %arg0 : i32, i32
  }
  func.func @transform_2(%arg0: i32, %arg1: i32) -> (i32, i32) {
    %c0_i32 = arith.constant 0 : i32
    return %arg1, %arg0 : i32, i32
  }
}

</mosaic_0001>

<llo_original>
// kernel: tpu_custom_call.1
$region0: #{tpu_custom_call.1}
  #allocation0 [shape = 'u32[]', space=smem, size = 0x4, offset = 0x4, fixed_abs, tag = 'smem constant byte address 0x4 - core index']
  #allocation1 [shape = 'u32[144,128]{1,0:T(1,128)}', space=vmem, size = 0x12000, scoped, tag = 'internal scratch']
  %s0 = inlined_call_operand.hbm [shape: f32[2,1024], index: 0, kind: input, shape index: {}]
  %s1 = inlined_call_operand.hbm [shape: f32[1,1024], index: 1, kind: input, shape index: {}]
  %s2 = inlined_call_operand.hbm [shape: f32[2,1024], index: 2, kind: output, shape index: {}]
  %s3 = sld [smem:[#allocation0]]
  $region26: #{tpu_custom_call.1} parent=0
    _
  %s5 = ssub.s32 1, %s3
  %s6 = scalar_select 0, %s5, %s3
  $region1: #{tpu_custom_call.1} parent=0
    #allocation2 [shape = 'u8[8192]{0}', space=vmem, size = 0x2000, scoped, tag = 'input window, operand 0, single buffered']
    #allocation3 [shape = 's32[1]{0}', space=sflag, size = 0x4, scoped, tag = 'scoped memory for tpu_custom_call.1']
    #allocation4 [shape = 's32[1]{0}', space=sflag, size = 0x4, scoped, tag = 'scoped memory for tpu_custom_call.1']
    #allocation5 [shape = 'u8[4096]{0}', space=vmem, size = 0x1000, scoped, tag = 'input window, operand 1, single buffered']
    #allocation6 [shape = 's32[1]{0}', space=sflag, size = 0x4, scoped, tag = 'scoped memory for tpu_custom_call.1']
    #allocation7 [shape = 'u8[8192]{0}', space=vmem, size = 0x2000, scoped, tag = 'output window, operand 0, single buffered']
    %7 = vsyncpa [#allocation3], 0
    %8 = vsyncpa [#allocation6], 0
    %9 = vsyncpa [#allocation4], 0
    // Predicated region
    $region2: #{tpu_custom_call.1} parent=1 // pred_check
      _
    $region3: #{tpu_custom_call.1} parent=1 // pred_check_branch
      %11 = sbr.rel (0) target = $region5
    $region4: #{tpu_custom_call.1} parent=1 // pred_region
      %s13 = ssub.s32 256, 256
      %14 = vsyncadd [#allocation3], %s13
      %s16 = sshll.u32 [#allocation2], 4
      %s17 = int_to_ptr.vmem [resolvable:$true] %s16
      %19 = dma.hbm_to_vmem [thread:$0]  %s0, 256, %s17, [#allocation3]
    $region5: #{tpu_custom_call.1} parent=1 // pred_fallthru
      _
    // Predicated region
    $region6: #{tpu_custom_call.1} parent=1 // pred_check
      _
    $region7: #{tpu_custom_call.1} parent=1 // pred_check_branch
      %21 = sbr.rel (0) target = $region9
    $region8: #{tpu_custom_call.1} parent=1 // pred_region
      %s23 = ssub.s32 128, 128
      %24 = vsyncadd [#allocation6], %s23
      %s26 = sshll.u32 [#allocation5], 4
      %s27 = int_to_ptr.vmem [resolvable:$true] %s26
      %29 = dma.hbm_to_vmem [thread:$0]  %s1, 128, %s27, [#allocation6]
    $region9: #{tpu_custom_call.1} parent=1 // pred_fallthru
      _
    // Predicated region
    $region10: #{tpu_custom_call.1} parent=1 // pred_check
      _
    $region11: #{tpu_custom_call.1} parent=1 // pred_check_branch
      %31 = sbr.rel (0) target = $region13
    $region12: #{tpu_custom_call.1} parent=1 // pred_region
      %32 = dma.done [#allocation3], 256
    $region13: #{tpu_custom_call.1} parent=1 // pred_fallthru
      _
    // Predicated region
    $region14: #{tpu_custom_call.1} parent=1 // pred_check
      _
    $region15: #{tpu_custom_call.1} parent=1 // pred_check_branch
      %34 = sbr.rel (0) target = $region17
    $region16: #{tpu_custom_call.1} parent=1 // pred_region
      %35 = dma.done [#allocation6], 128
    $region17: #{tpu_custom_call.1} parent=1 // pred_fallthru
      _
    %v36 = vld [vmem:[#allocation2] sm:$0xff]
    %v37 = vld [vmem:[#allocation2 + $0x8] sm:$0xff]
    %v38 = vld [vmem:[#allocation5] sm:$0xff]
    %v40 = vlaneseq
    %v41 = vshrl.u32 %v40, 7
    %v42 = vsub.s32 0, %v41
    %v43 = vrot.slane %v38, %v42
    %v44 = vlaneseq
    %v45 = vshrl.u32 %v44, 7
    %v46 = vsub.s32 1, %v45
    %v47 = vrot.slane %v38, %v46
    %v48 = vlaneseq
    %v49 = vshrl.u32 %v48, 7
    %v50 = vsub.s32 2, %v49
    %v51 = vrot.slane %v38, %v50
    %v52 = vlaneseq
    %v53 = vshrl.u32 %v52, 7
    %v54 = vsub.s32 3, %v53
    %v55 = vrot.slane %v38, %v54
    %v56 = vlaneseq
    %v57 = vshrl.u32 %v56, 7
    %v58 = vsub.s32 4, %v57
    %v59 = vrot.slane %v38, %v58
    %v60 = vlaneseq
    %v61 = vshrl.u32 %v60, 7
    %v62 = vsub.s32 5, %v61
    %v63 = vrot.slane %v38, %v62
    %v64 = vlaneseq
    %v65 = vshrl.u32 %v64, 7
    %v66 = vsub.s32 6, %v65
    %v67 = vrot.slane %v38, %v66
    %v68 = vlaneseq
    %v69 = vshrl.u32 %v68, 7
    %v70 = vsub.s32 7, %v69
    %v71 = vrot.slane %v38, %v70
    %v72 = vcombine.low %v43, %v47
    %v73 = vcombine.low %v51, %v55
    %v75 = vunpack.c.l.s4 1983009808
    %v76 = vunpack.c.0.s8 %v75
    %v77 = vlaneseq
    %v78 = vshrl.u32 %v77, 7
    %v79 = vsub.s32 %v76, %v78
    %v80 = vrot.slane %v72, %v79
    %v82 = vunpack.c.l.s4 1983009808
    %v83 = vunpack.c.0.s8 %v82
    %v84 = vlaneseq
    %v85 = vshrl.u32 %v84, 7
    %v86 = vsub.s32 %v83, %v85
    %v87 = vrot.slane %v73, %v86
    %v88 = vcombine.low %v80, %v87
    %v89 = vcombine.low %v59, %v63
    %v90 = vcombine.low %v67, %v71
    %v92 = vunpack.c.l.s4 1983009808
    %v93 = vunpack.c.0.s8 %v92
    %v94 = vlaneseq
    %v95 = vshrl.u32 %v94, 7
    %v96 = vsub.s32 %v93, %v95
    %v97 = vrot.slane %v89, %v96
    %v99 = vunpack.c.l.s4 1983009808
    %v100 = vunpack.c.0.s8 %v99
    %v101 = vlaneseq
    %v102 = vshrl.u32 %v101, 7
    %v103 = vsub.s32 %v100, %v102
    %v104 = vrot.slane %v90, %v103
    %v105 = vcombine.low %v97, %v104
    %v108 = vadd.f32 %v36, %v88
    %v109 = vadd.f32 %v37, %v105
    %110 = vst [vmem:[#allocation7] sm:$0xff] %v108
    %111 = vst [vmem:[#allocation7 + $0x8] sm:$0xff] %v109
    // Predicated region
    $region18: #{tpu_custom_call.1} parent=1 // pred_check
      _
    $region19: #{tpu_custom_call.1} parent=1 // pred_check_branch
      %113 = sbr.rel (0) target = $region21
    $region20: #{tpu_custom_call.1} parent=1 // pred_region
      %s115 = ssub.s32 256, 256
      %116 = vsyncadd [#allocation4], %s115
      %s118 = sshll.u32 [#allocation7], 4
      %s119 = int_to_ptr.vmem [resolvable:$true] %s118
      %121 = dma.vmem_to_hbm [thread:$0]  %s119, 256, %s2, [#allocation4]
    $region21: #{tpu_custom_call.1} parent=1 // pred_fallthru
      _
    // Predicated region
    $region22: #{tpu_custom_call.1} parent=1 // pred_check
      _
    $region23: #{tpu_custom_call.1} parent=1 // pred_check_branch
      %123 = sbr.rel (0) target = $region25
    $region24: #{tpu_custom_call.1} parent=1 // pred_region
      %124 = dma.done [#allocation4], 256
    $region25: #{tpu_custom_call.1} parent=1 // pred_fallthru
      _
    %125 = vsyncpa [#allocation3], 1
    %126 = vsyncpa [#allocation6], 1
    %127 = vsyncpa [#allocation4], 1

</llo_original>
